<compile_context>
chip_gen: v6e
topology: v6e:2x2x1
jax: 0.10.0
libtpu: 0.0.40
codegen_flags: <defaults>
</compile_context>

<pallas_src>
import functools
import math

import numpy as np

import jax
import jax.numpy as jnp
from jax.experimental import pallas as pl
from jax.experimental.pallas import tpu as pltpu


# ---------------------------------------------------------------------------
# Host-side: composite polyphase taps for the whole cascade.
# ---------------------------------------------------------------------------
def _stage_phase_taps(w, scale):
    """One stage (repeat-by-scale, then valid cross-correlation with w):
       out[q*scale + p] = sum_d G[p, d] * x[q + d]  (+ bias),  d in {0,1,2}."""
    K = 2 * scale - 1
    w = np.asarray(w, np.float64).reshape(K)
    G = np.zeros((scale, 3), np.float64)
    for p in range(scale):
        for k in range(K):
            G[p, (p + k) // scale] += w[k]
    return G


def _composite_polyphase(scales, weights, biases):
    """Compose all stages into a single (mod S)-periodic map + scalar bias:
       pre_trim[t] = sum_d Wc[t % S, d] * x[t // S + d] + b_total
    (exact for every valid t when x is zero-padded on the right)."""
    Wc = np.ones((1, 1), np.float64)
    b_total = 0.0
    for s, w, b in zip(scales, weights, biases):
        s = int(s)
        w = np.asarray(w, np.float64)
        G = _stage_phase_taps(w, s)
        P_prev, E_prev = Wc.shape
        E_new = (P_prev + 1) // P_prev + E_prev
        Wn = np.zeros((P_prev * s, E_new), np.float64)
        for p in range(P_prev * s):
            pi, r = p % s, p // s
            for d in range(3):
                u_div, u_mod = divmod(r + d, P_prev)
                Wn[p, u_div:u_div + E_prev] += G[pi, d] * Wc[u_mod]
        Wc = Wn
        b_total = b_total * float(np.sum(w)) + float(np.asarray(b))
    return Wc, b_total


def _fold_trim(Wc):
    """Fold the final [1:-1] time trim: final[t] = pre_trim[t + 1]."""
    S, D = Wc.shape
    Wc2 = np.zeros((S, D + 1), np.float64)
    if S > 1:
        Wc2[:S - 1, :D] = Wc[1:, :]
    Wc2[S - 1, 1:] = Wc[0, :]
    return Wc2


def _band_matrix(Wc2, q_sub):
    """Banded upsampling matrix M with
       (x_slab @ M)[r, q*S + p] = sum_d Wc2[p, d] * x_slab[r, q + d]."""
    S, D2 = Wc2.shape
    M = np.zeros((q_sub + D2 - 1, q_sub * S), np.float64)
    qs = np.arange(q_sub)
    for d in range(D2):
        for p in range(S):
            M[qs + d, qs * S + p] = Wc2[p, d]
    return M.astype(np.float32)


# ---------------------------------------------------------------------------
# Pallas kernel: one grid step = (r_tile rows) x (n_sub * q_sub * S output lanes)
# ---------------------------------------------------------------------------
def _fused_upsample_kernel(x_ref, m_ref, o_ref, *, q_sub, n_sub, kin_sub,
                           sub_lanes, bias):
    """x_ref: VMEM (1, r_tile, kin_tile)       pre-upsample input slab (with halo)
       m_ref: VMEM (kin_sub, sub_lanes)        banded polyphase matrix (resident)
       o_ref: VMEM (r_tile, n_sub*sub_lanes)   upsampled output tile (lane-dense)"""
    for t in range(n_sub):  # static unroll (n_sub <= 32); static lane slices
        xs = x_ref[0, :, t * q_sub: t * q_sub + kin_sub]
        # MXU matmul; reads the resident band matrix directly from VMEM.
        res = jnp.dot(xs, m_ref[...], preferred_element_type=jnp.float32)
        if bias != 0.0:                        # compile-time constant bias
            res = res + bias
        o_ref[:, t * sub_lanes: (t + 1) * sub_lanes] = res.astype(o_ref.dtype)


# ---------------------------------------------------------------------------
# Wrapper
# ---------------------------------------------------------------------------
_TARGET_OUT_BYTES = 4 << 20    # ~4 MB of output per grid step
_MAX_SUB_UNROLL = 32           # bound static unroll / vreg pressure


def _cdiv(a, b):
    return -(-a // b)


def _round_up(a, b):
    return _cdiv(a, b) * b


def _vmem_budget_bytes():
    cap = 64 << 20                             # conservative fallback (v7x-sized)
    try:
        cap = int(getattr(pltpu.get_tpu_info(), "vmem_capacity_bytes", cap))
    except Exception:
        pass
    return max(32 << 20, (cap * 3) // 4)       # ~75% of physical VMEM


def upsample_network_forward(mels, scales, weights, biases, out_dtype=None):
    """mels: (N, C, L) -> (N, C, (L-2)*prod(scales)); matches UpsampleNetwork.forward.
    weights[i]: (2*scales[i]-1,) conv taps, biases[i]: () bias (concrete values)."""
    N, C, L = mels.shape
    assert L >= 3, "need at least 3 mel frames"
    R = N * C
    S = int(np.prod(scales)) if len(scales) else 1
    q_total = L - 2
    t_out = q_total * S
    out_dtype = mels.dtype if out_dtype is None else jnp.dtype(out_dtype)

    # Composite polyphase taps (all stages + trim folded in), computed on host.
    Wc, b_total = _composite_polyphase(scales, weights, biases)
    Wc2 = _fold_trim(Wc)
    d2 = Wc2.shape[1]

    itemsize = jnp.dtype(mels.dtype).itemsize
    out_itemsize = jnp.dtype(out_dtype).itemsize
    m_dtype = jnp.bfloat16 if mels.dtype == jnp.bfloat16 else jnp.float32
    m_itemsize = jnp.dtype(m_dtype).itemsize

    # --- tiling plan -------------------------------------------------------
    r_tile = min(128, _round_up(R, 8))             # rows per step (MXU M dim)

    q_unit = 128 // math.gcd(S, 128)
    if q_unit * S <= 1024:
        # sub_lanes is a multiple of 128; fatten toward 1024 lanes per MXU push.
        mult = max(1, 1024 // (q_unit * S))
        q_sub = q_unit * max(1, min(mult, _cdiv(q_total, q_unit)))
    else:
        # lcm(S,128) too large (e.g. S coprime with 128): keep the resident band
        # matrix small; 128-lane alignment is recovered at the tile level below,
        # accepting masked sub-stores inside VMEM.
        q_sub = _round_up(max(8, d2 - 1), 8)
    sub_lanes = q_sub * S
    kin_sub = q_sub + d2 - 1
    n_sub_unit = 128 // math.gcd(sub_lanes, 128)   # keeps q_tile*S % 128 == 0

    target_lanes = max(sub_lanes, _TARGET_OUT_BYTES // max(1, r_tile * out_itemsize))
    n_sub = max(1, min(target_lanes // sub_lanes, _cdiv(q_total, q_sub),
                       _MAX_SUB_UNROLL))
    n_sub = max(n_sub_unit, _round_up(n_sub, n_sub_unit))

    budget = _vmem_budget_bytes()

    def _est(r_t, n_s):
        q_t = q_sub * n_s
        return (2 * r_t * (q_t + d2 - 1) * itemsize        # input slab, dbl-buffered
                + 2 * r_t * q_t * S * out_itemsize         # output tile, dbl-buffered
                + 2 * kin_sub * sub_lanes * m_itemsize     # resident band matrix
                + (2 << 20))                               # compiler scratch slack

    while _est(r_tile, n_sub) > (budget * 6) // 10:
        if n_sub > n_sub_unit:
            n_sub -= n_sub_unit
        elif r_tile > 8:
            r_tile = max(8, r_tile // 2)
        else:
            break

    n_r = _cdiv(R, r_tile)
    q_tile = q_sub * n_sub
    n_t = _cdiv(q_total, q_tile)

    # Keep >= 4 grid steps when there is enough work (megacore split + pipeline).
    if n_r * n_t < 4 and R * t_out * out_itemsize >= (4 << 20):
        want_t = _cdiv(4, n_r)
        n_sub_w = max(n_sub_unit,
                      _round_up(_cdiv(q_total, q_sub * want_t), n_sub_unit))
        n_sub = min(n_sub, n_sub_w)
        q_tile = q_sub * n_sub
        n_t = _cdiv(q_total, q_tile)

    q_pad = n_t * q_tile
    kin_tile = q_tile + d2 - 1
    R_pad = n_r * r_tile

    # --- inputs (pre-upsample domain: tiny, ~1/S of the output) ------------
    x = mels.reshape(R, L)
    need_cols = q_pad + d2 - 1
    x_pad = jnp.pad(x, ((0, R_pad - R), (0, max(0, need_cols - L))))
    if n_t == 1:
        x_slabs = x_pad[None, :, :kin_tile]
    else:
        starts = np.arange(n_t) * q_tile
        idx = starts[:, None] + np.arange(kin_tile)[None, :]
        x_slabs = jnp.transpose(x_pad[:, idx], (1, 0, 2))   # (n_t, R_pad, kin_tile)

    m_sub = jnp.asarray(_band_matrix(Wc2, q_sub)).astype(m_dtype)  # (kin_sub, sub_lanes)

    # --- pallas call -------------------------------------------------------
    kernel = functools.partial(_fused_upsample_kernel,
                               q_sub=q_sub, n_sub=n_sub, kin_sub=kin_sub,
                               sub_lanes=sub_lanes, bias=float(b_total))

    out = pl.pallas_call(
        kernel,
        out_shape=jax.ShapeDtypeStruct((R, t_out), out_dtype),
        grid_spec=pltpu.PrefetchScalarGridSpec(
            num_scalar_prefetch=0,
            grid=(n_r, n_t),
            in_specs=[
                # input slab per (row tile, time tile)
                pl.BlockSpec((1, r_tile, kin_tile), lambda i, j: (j, i, 0)),
                # banded polyphase matrix: constant index_map -> DMA'd once,
                # VMEM-resident; kept small enough (via q_sub choice) that the
                # default double buffer is negligible.
                pl.BlockSpec((kin_sub, sub_lanes), lambda i, j: (0, 0)),
            ],
            # Output written exactly once, lane-dense; edge blocks (time and
            # row remainders) are masked on writeback -> no post-kernel trim.
            out_specs=pl.BlockSpec((r_tile, q_tile * S), lambda i, j: (i, j)),
        ),
        compiler_params=pltpu.CompilerParams(
            dimension_semantics=("parallel", "parallel"),
            vmem_limit_bytes=int(budget),
        ),
    )(x_slabs, m_sub)

    return out.reshape(N, C, t_out)


# ---------------------------------------------------------------------------
# Pure-JAX reference (mirrors the PyTorch module: repeat + valid conv per stage)
# ---------------------------------------------------------------------------
def _repeat_time(x, scale):
    R, T = x.shape
    return jnp.broadcast_to(x[:, :, None], (R, T, scale)).reshape(R, T * scale)


def _ref_forward(mels, scales, weights, biases):
    N, C, L = mels.shape
    x = mels.reshape(N * C, L).astype(jnp.float32)
    for scale, w, b in zip(scales, weights, biases):
        x = _repeat_time(x, int(scale))
        K = int(w.shape[0])
        T_out = x.shape[1] - K + 1
        out = jnp.zeros((x.shape[0], T_out), jnp.float32)
        for k in range(K):
            out = out + w[k] * x[:, k:k + T_out]
        x = out + b
    return x.reshape(N, C, -1)[:, :, 1:-1]


# ---------------------------------------------------------------------------
# Demo / self-test
# ---------------------------------------------------------------------------
def _init_params(key, scales):
    weights, biases = [], []
    keys = jax.random.split(key, len(scales)) if len(scales) else []
    for s, kw in zip(scales, keys):
        K = 2 * s - 1
        bound = 1.0 / (K ** 0.5)                       # Conv2d default init, fan_in = K
        weights.append(jax.random.uniform(kw, (K,), jnp.float32, -bound, bound))
        biases.append(jnp.zeros((), jnp.float32))      # module zeroes bias at init
    return weights, biases


def _run_case(key, N, C, L, scales, nonzero_bias=False):
    k_mel, k_par, k_b = jax.random.split(key, 3)
    mels = jax.random.normal(k_mel, (N, C, L), jnp.float32)
    weights, biases = _init_params(k_par, scales)
    if nonzero_bias:  # exercise the (trained) bias path
        biases = [0.1 * jax.random.normal(kb, (), jnp.float32)
                  for kb in jax.random.split(k_b, len(scales))]

    out = jax.block_until_ready(upsample_network_forward(mels, scales, weights, biases))
    ref = _ref_forward(mels, scales, weights, biases)

    S = int(np.prod(scales)) if len(scales) else 1
    assert out.shape == (N, C, (L - 2) * S), (out.shape, (N, C, (L - 2) * S))
    # Per-dtype tolerance: f32 path uses f32 MXU accumulation (errors ~1e-6 in
    # practice); the bound also tolerates reduced-precision matmul modes while
    # still catching indexing / weight-composition bugs (O(1) mismatches).
    tol = 1e-2 if mels.dtype == jnp.float32 else 5e-2
    err = float(jnp.max(jnp.abs(out - ref)))
    assert jnp.allclose(out, ref, atol=tol, rtol=tol), \
        f"mismatch vs reference, max abs err={err:e}"
    return out


if __name__ == "__main__":
    key = jax.random.PRNGKey(0)
    k1, k2, k3 = jax.random.split(key, 3)
    # Small demo matching the module layout (N, C, L): single partial-block path.
    _run_case(k1, N=2, C=4, L=10, scales=(2, 3))
    # Larger case: multi-step time grid with a masked partial edge block,
    # in-kernel sub-blocks, nonzero biases.
    _run_case(k2, N=2, C=4, L=2307, scales=(4, 4), nonzero_bias=True)
    # Row count not a multiple of 8 (masked partial rows, r_tile > R).
    _run_case(k3, N=1, C=3, L=20, scales=(2, 3))
    print("KERNEL_OK")
</pallas_src>

<mosaic_0001>
module attributes {stable_mosaic.version = 11 : i64} {
  func.func @_fused_upsample_kernel(%arg0: i32, %arg1: i32, %arg2: memref<1x8x68xf32, #tpu.memory_space<vmem>>, %arg3: memref<68x384xf32, #tpu.memory_space<vmem>>, %arg4: memref<8x384xf32, #tpu.memory_space<vmem>>) attributes {dimension_semantics = [#tpu.dimension_semantics<parallel>, #tpu.dimension_semantics<parallel>], iteration_bounds = array<i64: 1, 1>, scalar_prefetch = 0 : i64, scratch_operands = 0 : i64, tpu.core_type = #tpu.core_type<tc>, window_params = [{transform_indices = @transform_0, window_bounds = array<i64: 1, 8, 68>}, {pipeline_mode = #tpu.pipeline_mode<synchronous>, transform_indices = @transform_1, window_bounds = array<i64: 68, 384>}, {transform_indices = @transform_2, window_bounds = array<i64: 8, 384>}]} {
    %c0 = arith.constant 0 : index
    %c0_0 = arith.constant 0 : index
    %c0_1 = arith.constant 0 : index
    %0 = vector.load %arg2[%c0, %c0_0, %c0_1] : memref<1x8x68xf32, #tpu.memory_space<vmem>>, vector<1x8x68xf32>
    %1 = vector.shape_cast %0 : vector<1x8x68xf32> to vector<8x68xf32>
    %c0_2 = arith.constant 0 : index
    %c0_3 = arith.constant 0 : index
    %2 = vector.load %arg3[%c0_2, %c0_3] : memref<68x384xf32, #tpu.memory_space<vmem>>, vector<68x384xf32>
    %cst = arith.constant dense<0.000000e+00> : vector<8x384xf32>
    %3 = tpu.matmul %1, %2, %cst {dimension_numbers = #tpu.dot_dimension_numbers<[1], [0], [0], [1], [0, 0, 1, 1], [], []>} : vector<8x68xf32>, vector<68x384xf32>, vector<8x384xf32> -> vector<8x384xf32>
    %c0_4 = arith.constant 0 : index
    %c0_5 = arith.constant 0 : index
    %4 = vector.load %arg4[%c0_4, %c0_5] : memref<8x384xf32, #tpu.memory_space<vmem>>, vector<8x384xf32>
    tpu.vector_store %arg4[%c0_4, %c0_5], %3 {strides = array<i32>} : memref<8x384xf32, #tpu.memory_space<vmem>>, vector<8x384xf32>,
    return
  }
  func.func @transform_0(%arg0: i32, %arg1: i32) -> (i32, i32, i32) {
    %c0_i32 = arith.constant 0 : i32
    %c0_i32_0 = arith.constant 0 : i32
    return %arg1, %arg0, %c0_i32 : i32, i32, i32
  }
  func.func @transform_1(%arg0: i32, %arg1: i32) -> (i32, i32) {
    %c0_i32 = arith.constant 0 : i32
    %c0_i32_0 = arith.constant 0 : i32
    %c0_i32_1 = arith.constant 0 : i32
    return %c0_i32, %c0_i32_0 : i32, i32
  }
  func.func @transform_2(%arg0: i32, %arg1: i32) -> (i32, i32) {
    %c0_i32 = arith.constant 0 : i32
    return %arg0, %arg1 : i32, i32
  }
}

</mosaic_0001>

<llo_original>
// kernel: tpu_custom_call.1
$region0: #{tpu_custom_call.1}
  #allocation0 [shape = 'u32[]', space=smem, size = 0x4, offset = 0x4, fixed_abs, tag = 'smem constant byte address 0x4 - core index']
  #allocation1 [shape = 'u32[144,128]{1,0:T(1,128)}', space=vmem, size = 0x12000, scoped, tag = 'internal scratch']
  %s0 = inlined_call_operand.hbm [shape: f32[1,8,68], index: 0, kind: input, shape index: {}]
  %s1 = inlined_call_operand.hbm [shape: f32[68,384], index: 1, kind: input, shape index: {}]
  %s2 = inlined_call_operand.hbm [shape: f32[8,48], index: 2, kind: output, shape index: {}]
  %s3 = sld [smem:[#allocation0]]
  $region26: #{tpu_custom_call.1} parent=0
    _
  %s5 = ssub.s32 1, %s3
  %s6 = scalar_select 0, %s5, %s3
  $region1: #{tpu_custom_call.1} parent=0
    #allocation2 [shape = 'u8[4096]{0}', space=vmem, size = 0x1000, scoped, tag = 'input window, operand 0, single buffered']
    #allocation3 [shape = 's32[1]{0}', space=sflag, size = 0x4, scoped, tag = 'scoped memory for tpu_custom_call.1']
    #allocation4 [shape = 's32[1]{0}', space=sflag, size = 0x4, scoped, tag = 'scoped memory for tpu_custom_call.1']
    #allocation5 [shape = 'u8[110592]{0}', space=vmem, size = 0x1b000, scoped, tag = 'input window, operand 1, single buffered']
    #allocation6 [shape = 's32[1]{0}', space=sflag, size = 0x4, scoped, tag = 'scoped memory for tpu_custom_call.1']
    #allocation7 [shape = 'u8[12288]{0}', space=vmem, size = 0x3000, scoped, tag = 'output window, operand 0, single buffered']
    %7 = vsyncpa [#allocation3], 0
    %8 = vsyncpa [#allocation6], 0
    %9 = vsyncpa [#allocation4], 0
    // Predicated region
    $region2: #{tpu_custom_call.1} parent=1 // pred_check
      _
    $region3: #{tpu_custom_call.1} parent=1 // pred_check_branch
      %11 = sbr.rel (0) target = $region5
    $region4: #{tpu_custom_call.1} parent=1 // pred_region
      %s13 = ssub.s32 128, 128
      %14 = vsyncadd [#allocation3], %s13
      %s16 = sshll.u32 [#allocation2], 4
      %s17 = int_to_ptr.vmem [resolvable:$true] %s16
      %19 = dma.hbm_to_vmem [thread:$0]  %s0, 128, %s17, [#allocation3]
    $region5: #{tpu_custom_call.1} parent=1 // pred_fallthru
      _
    // Predicated region
    $region6: #{tpu_custom_call.1} parent=1 // pred_check
      _
    $region7: #{tpu_custom_call.1} parent=1 // pred_check_branch
      %21 = sbr.rel (0) target = $region9
    $region8: #{tpu_custom_call.1} parent=1 // pred_region
      %s23 = ssub.s32 3456, 3456
      %24 = vsyncadd [#allocation6], %s23
      %s25 = sshll.u32 [#allocation5], 4
      %s26 = int_to_ptr.vmem [resolvable:$true] %s25
      %31 = dma.hbm_to_vmem [thread:$0]  %s1, 3456, %s26, [#allocation6], 384, 384, 24
    $region9: #{tpu_custom_call.1} parent=1 // pred_fallthru
      _
    // Predicated region
    $region10: #{tpu_custom_call.1} parent=1 // pred_check
      _
    $region11: #{tpu_custom_call.1} parent=1 // pred_check_branch
      %33 = sbr.rel (0) target = $region13
    $region12: #{tpu_custom_call.1} parent=1 // pred_region
      %34 = dma.done [#allocation3], 128
    $region13: #{tpu_custom_call.1} parent=1 // pred_fallthru
      _
    // Predicated region
    $region14: #{tpu_custom_call.1} parent=1 // pred_check
      _
    $region15: #{tpu_custom_call.1} parent=1 // pred_check_branch
      %36 = sbr.rel (0) target = $region17
    $region16: #{tpu_custom_call.1} parent=1 // pred_region
      %37 = dma.done [#allocation6], 3456
    $region17: #{tpu_custom_call.1} parent=1 // pred_fallthru
      _
    %v38 = vld [vmem:[#allocation2] sm:$0xff]
    %v39 = vld [vmem:[#allocation5] sm:$0xff]
    %v40 = vld [vmem:[#allocation5 + $0x8] sm:$0xff]
    %v41 = vld [vmem:[#allocation5 + $0x10] sm:$0xff]
    %v42 = vld [vmem:[#allocation5 + $0x18] sm:$0xff]
    %v43 = vld [vmem:[#allocation5 + $0x20] sm:$0xff]
    %v44 = vld [vmem:[#allocation5 + $0x28] sm:$0xff]
    %v45 = vld [vmem:[#allocation5 + $0x30] sm:$0xff]
    %v46 = vld [vmem:[#allocation5 + $0x38] sm:$0xff]
    %v47 = vld [vmem:[#allocation5 + $0x40] sm:$0xff]
    %v48 = vld [vmem:[#allocation5 + $0x48] sm:$0xff]
    %v49 = vld [vmem:[#allocation5 + $0x50] sm:$0xff]
    %v50 = vld [vmem:[#allocation5 + $0x58] sm:$0xff]
    %v51 = vld [vmem:[#allocation5 + $0x60] sm:$0xff]
    %v52 = vld [vmem:[#allocation5 + $0x68] sm:$0xff]
    %v53 = vld [vmem:[#allocation5 + $0x70] sm:$0xff]
    %v54 = vld [vmem:[#allocation5 + $0x78] sm:$0xff]
    %v55 = vld [vmem:[#allocation5 + $0x80] sm:$0xff]
    %v56 = vld [vmem:[#allocation5 + $0x88] sm:$0xff]
    %v57 = vld [vmem:[#allocation5 + $0x90] sm:$0xff]
    %v58 = vld [vmem:[#allocation5 + $0x98] sm:$0xff]
    %v59 = vld [vmem:[#allocation5 + $0xa0] sm:$0xff]
    %v60 = vld [vmem:[#allocation5 + $0xa8] sm:$0xff]
    %v61 = vld [vmem:[#allocation5 + $0xb0] sm:$0xff]
    %v62 = vld [vmem:[#allocation5 + $0xb8] sm:$0xff]
    %v63 = vld [vmem:[#allocation5 + $0xc0] sm:$0xf]
    %v64 = vld [vmem:[#allocation5 + $0xc8] sm:$0xf]
    %v65 = vld [vmem:[#allocation5 + $0xd0] sm:$0xf]
    %vm66 = vcmask 556032
    %v68 = vsel %vm66, %v38, 0
    %vm70 = vcmask 1043456
    %v72 = vsel %vm70, %v63, 0
    %v75 = vsel %vm70, %v64, 0
    %v78 = vsel %vm70, %v65, 0
    %80 = vmatprep.subr.mxu0 0.0
    %81 = vmatpush1.msra.mxu0 0.0
    %82 = vmatprep.subr.mxu0 0.0
    %83 = vmatpush1.msra.mxu0 0.0
    %84 = vmatprep.subr.mxu0 0.0
    %85 = vmatpush1.msra.mxu0 0.0
    %86 = vmatprep.subr.mxu0 0.0
    %87 = vmatpush1.msra.mxu0 0.0
    %88 = vmatprep.subr.mxu0 0.0
    %89 = vmatpush1.msra.mxu0 0.0
    %90 = vmatprep.subr.mxu0 0.0
    %91 = vmatpush1.msra.mxu0 0.0
    %92 = vmatprep.subr.mxu0 0.0
    %93 = vmatpush1.msra.mxu0 0.0
    %94 = vmatprep.subr.mxu0 %v75
    %95 = vmatpush1.msra.mxu0 %v72
    %96 = vmatprep.subr.mxu0 %v61
    %97 = vmatpush1.msra.mxu0 %v60
    %98 = vmatprep.subr.mxu0 %v58
    %99 = vmatpush1.msra.mxu0 %v57
    %100 = vmatprep.subr.mxu0 %v55
    %101 = vmatpush1.msra.mxu0 %v54
    %102 = vmatprep.subr.mxu0 %v52
    %103 = vmatpush1.msra.mxu0 %v51
    %104 = vmatprep.subr.mxu0 %v49
    %105 = vmatpush1.msra.mxu0 %v48
    %106 = vmatprep.subr.mxu0 %v46
    %107 = vmatpush1.msra.mxu0 %v45
    %108 = vmatprep.subr.mxu0 %v43
    %109 = vmatpush1.msra.mxu0 %v42
    %110 = vmatprep.subr.mxu0 %v40
    %111 = vmatpush1.msra.mxu0 %v39
    %112 = vmatprep.subr.mxu0 0.0
    %113 = vmatpush2.msra.mxu0 0.0
    %114 = vmatprep.subr.mxu0 0.0
    %115 = vmatpush2.msra.mxu0 0.0
    %116 = vmatprep.subr.mxu0 0.0
    %117 = vmatpush2.msra.mxu0 0.0
    %118 = vmatprep.subr.mxu0 0.0
    %119 = vmatpush2.msra.mxu0 0.0
    %120 = vmatprep.subr.mxu0 0.0
    %121 = vmatpush2.msra.mxu0 0.0
    %122 = vmatprep.subr.mxu0 0.0
    %123 = vmatpush2.msra.mxu0 0.0
    %124 = vmatprep.subr.mxu0 0.0
    %125 = vmatpush2.msra.mxu0 0.0
    %126 = vmatprep.subr.mxu0 0.0
    %127 = vmatpush2.msra.mxu0 0.0
    %128 = vmatprep.subr.mxu0 0.0
    %129 = vmatpush2.msra.mxu0 0.0
    %130 = vmatprep.subr.mxu0 0.0
    %131 = vmatpush2.msra.mxu0 0.0
    %132 = vmatprep.subr.mxu0 0.0
    %133 = vmatpush2.msra.mxu0 0.0
    %134 = vmatprep.subr.mxu0 0.0
    %135 = vmatpush2.msra.mxu0 0.0
    %136 = vmatprep.subr.mxu0 0.0
    %137 = vmatpush2.msra.mxu0 0.0
    %138 = vmatprep.subr.mxu0 0.0
    %139 = vmatpush2.msra.mxu0 0.0
    %140 = vmatprep.subr.mxu0 0.0
    %141 = vmatpush2.msra.mxu0 0.0
    %142 = vmatprep.subr.mxu0 0.0
    %143 = vmatpush2.msra.mxu0 0.0
    %144 = vmatprep.mubr.f32.mxu0 0.0
    %145 = vmatmul.mubr.f32.gmra.mxu0 %v68
    %v146 = vpop.f32.mrf.mxu0
    %v147 = vadd.f32 0.0, %v146
    %v148 = vpop.f32.mrf.mxu0
    %v149 = vadd.f32 0.0, %v148
    %150 = vdwg.mxu0
    %151 = vmatprep.subr.mxu0 0.0
    %152 = vmatpush1.msra.mxu0 0.0
    %153 = vmatprep.subr.mxu0 0.0
    %154 = vmatpush1.msra.mxu0 0.0
    %155 = vmatprep.subr.mxu0 0.0
    %156 = vmatpush1.msra.mxu0 0.0
    %157 = vmatprep.subr.mxu0 0.0
    %158 = vmatpush1.msra.mxu0 0.0
    %159 = vmatprep.subr.mxu0 0.0
    %160 = vmatpush1.msra.mxu0 0.0
    %161 = vmatprep.subr.mxu0 0.0
    %162 = vmatpush1.msra.mxu0 0.0
    %163 = vmatprep.subr.mxu0 0.0
    %164 = vmatpush1.msra.mxu0 0.0
    %165 = vmatprep.subr.mxu0 0.0
    %166 = vmatpush1.msra.mxu0 %v78
    %167 = vmatprep.subr.mxu0 0.0
    %168 = vmatpush1.msra.mxu0 %v62
    %169 = vmatprep.subr.mxu0 0.0
    %170 = vmatpush1.msra.mxu0 %v59
    %171 = vmatprep.subr.mxu0 0.0
    %172 = vmatpush1.msra.mxu0 %v56
    %173 = vmatprep.subr.mxu0 0.0
    %174 = vmatpush1.msra.mxu0 %v53
    %175 = vmatprep.subr.mxu0 0.0
    %176 = vmatpush1.msra.mxu0 %v50
    %177 = vmatprep.subr.mxu0 0.0
    %178 = vmatpush1.msra.mxu0 %v47
    %179 = vmatprep.subr.mxu0 0.0
    %180 = vmatpush1.msra.mxu0 %v44
    %181 = vmatprep.subr.mxu0 0.0
    %182 = vmatpush1.msra.mxu0 %v41
    %183 = vmatprep.subr.mxu0 0.0
    %184 = vmatpush2.msra.mxu0 0.0
    %185 = vmatprep.subr.mxu0 0.0
    %186 = vmatpush2.msra.mxu0 0.0
    %187 = vmatprep.subr.mxu0 0.0
    %188 = vmatpush2.msra.mxu0 0.0
    %189 = vmatprep.subr.mxu0 0.0
    %190 = vmatpush2.msra.mxu0 0.0
    %191 = vmatprep.subr.mxu0 0.0
    %192 = vmatpush2.msra.mxu0 0.0
    %193 = vmatprep.subr.mxu0 0.0
    %194 = vmatpush2.msra.mxu0 0.0
    %195 = vmatprep.subr.mxu0 0.0
    %196 = vmatpush2.msra.mxu0 0.0
    %197 = vmatprep.subr.mxu0 0.0
    %198 = vmatpush2.msra.mxu0 0.0
    %199 = vmatprep.subr.mxu0 0.0
    %200 = vmatpush2.msra.mxu0 0.0
    %201 = vmatprep.subr.mxu0 0.0
    %202 = vmatpush2.msra.mxu0 0.0
    %203 = vmatprep.subr.mxu0 0.0
    %204 = vmatpush2.msra.mxu0 0.0
    %205 = vmatprep.subr.mxu0 0.0
    %206 = vmatpush2.msra.mxu0 0.0
    %207 = vmatprep.subr.mxu0 0.0
    %208 = vmatpush2.msra.mxu0 0.0
    %209 = vmatprep.subr.mxu0 0.0
    %210 = vmatpush2.msra.mxu0 0.0
    %211 = vmatprep.subr.mxu0 0.0
    %212 = vmatpush2.msra.mxu0 0.0
    %213 = vmatprep.subr.mxu0 0.0
    %214 = vmatpush2.msra.mxu0 0.0
    %215 = vmatprep.mubr.f32.mxu0 0.0
    %216 = vmatmul.mubr.f32.gmra.mxu0 %v68
    %v217 = vpop.f32.mrf.mxu0
    %v218 = vadd.f32 0.0, %v217
    %v219 = vpop.f32.mrf.mxu0
    %220 = vdwg.mxu0
    %221 = vst [vmem:[#allocation7] sm:$0xff] %v147
    %222 = vst [vmem:[#allocation7 + $0x8] sm:$0xff] %v149
    %223 = vst [vmem:[#allocation7 + $0x10] sm:$0xff] %v218
    // Predicated region
    $region18: #{tpu_custom_call.1} parent=1 // pred_check
      _
    $region19: #{tpu_custom_call.1} parent=1 // pred_check_branch
      %225 = sbr.rel (0) target = $region21
    $region20: #{tpu_custom_call.1} parent=1 // pred_region
      %s227 = ssub.s32 384, 128
      %228 = vsyncadd [#allocation4], %s227
      %s230 = sshll.u32 [#allocation7], 4
      %s231 = int_to_ptr.vmem [resolvable:$true] %s230
      %233 = dma.vmem_to_hbm [thread:$0]  %s231, 128, %s2, [#allocation4]
    $region21: #{tpu_custom_call.1} parent=1 // pred_fallthru
      _
    // Predicated region
    $region22: #{tpu_custom_call.1} parent=1 // pred_check
      _
    $region23: #{tpu_custom_call.1} parent=1 // pred_check_branch
      %235 = sbr.rel (0) target = $region25
    $region24: #{tpu_custom_call.1} parent=1 // pred_region
      %236 = dma.done [#allocation4], 384
    $region25: #{tpu_custom_call.1} parent=1 // pred_fallthru
      _
    %237 = vsyncpa [#allocation3], 1
    %238 = vsyncpa [#allocation6], 1
    %239 = vsyncpa [#allocation4], 1

</llo_original>
